<compile_context>
chip_gen: v7x
topology: tpu7x:2x2x1
jax: 0.10.0
libtpu: 0.0.40
codegen_flags: <defaults>
</compile_context>

<pallas_src>
import functools

import jax
import jax.numpy as jnp
from jax.experimental import pallas as pl
from jax.experimental.pallas import tpu as pltpu


def _round_up(n, m):
    return ((n + m - 1) // m) * m


def _mix_layer_kernel(x_ref, a_ref, w_ref, b_ref, lb_ref,
                      wd_ref, bd_ref, wu_ref, bu_ref,
                      out_ref, acc_ref, acca_ref):
    """One (row-tile, K-tile) step of:
         p   = x @ W + b + (x @ A) @ B_scaled        (backbone + LoRA parallel delta)
         out = p + gelu(p @ Wd + bd) @ Wu + bu       (adapter sequential delta)
    """
    k = pl.program_id(1)

    @pl.when(k == 0)
    def _init():
        acc_ref[...] = jnp.zeros_like(acc_ref)
        acca_ref[...] = jnp.zeros_like(acca_ref)

    x = x_ref[...]
    # K-tiled backbone matmul and LoRA down-projection, f32 MXU accumulation.
    acc_ref[...] += jnp.dot(x, w_ref[...], preferred_element_type=jnp.float32)
    acca_ref[...] += jnp.dot(x, a_ref[...], preferred_element_type=jnp.float32)

    @pl.when(k == pl.num_programs(1) - 1)
    def _epilogue():
        # LoRA up-projection (scaling pre-folded into B) + backbone bias (f32).
        lo = jnp.dot(acca_ref[...].astype(lb_ref.dtype), lb_ref[...],
                     preferred_element_type=jnp.float32)
        p = acc_ref[...] + lo + b_ref[...]                       # parallel_output

        # Sequential delta: bottleneck adapter (down -> GELU -> up), rate 1.
        h = jnp.dot(p.astype(wd_ref.dtype), wd_ref[...],
                    preferred_element_type=jnp.float32) + bd_ref[...]
        # TODO(synk): exact adapter activation depends on AdapterSequentialLayer config.
        h = jax.nn.gelu(h, approximate=True)
        ad = jnp.dot(h.astype(wu_ref.dtype), wu_ref[...],
                     preferred_element_type=jnp.float32) + bu_ref[...]

        out_ref[...] = (p + ad).astype(out_ref.dtype)            # sequential_output


def _vmem_limit_bytes():
    # ~75% of physical VMEM, capped at 100 MiB: v5e/v6e (128 MiB) -> 96 MiB,
    # v7x (64 MiB) -> 48 MiB.  Conservative fallback if the query is unavailable.
    try:
        cap = int(pltpu.get_tpu_info().vmem_capacity_bytes)
        return min((cap * 3) // 4, 100 * 1024 * 1024)
    except Exception:
        return 48 * 1024 * 1024


@functools.partial(jax.jit, static_argnames=("tm", "tk", "compute_dtype"))
def mix_layer_parallel(x, w, b, lora_a, lora_b, lora_scaling,
                       wd, bd, wu, bu, *, tm=512, tk=512,
                       compute_dtype="bfloat16"):
    """x: (B, S, d_in). Returns (B, S, d_out) in x.dtype."""
    B, S, d_in = x.shape
    d_out = w.shape[1]
    d_bot = wd.shape[1]
    lora_r = lora_a.shape[1]
    out_dtype = x.dtype
    cdt = jnp.dtype(compute_dtype)

    # Lane-align every matmul dimension to 128; make d_in a multiple of the K tile.
    d_out_p = _round_up(d_out, 128)
    d_bot_p = _round_up(d_bot, 128)
    r_p = _round_up(lora_r, 128)
    d_in_p = _round_up(d_in, 128)
    tk_eff = min(tk, d_in_p)
    d_in_p = _round_up(d_in_p, tk_eff)

    # Row tiling: bf16 packs two rows per sublane -> 16-row granularity; keep
    # at least 2 row tiles when M allows so both v7x TensorCores get work.
    M = B * S
    row_mult = 16 if cdt == jnp.dtype(jnp.bfloat16) else 8
    tm_eff = min(tm, _round_up(M, row_mult))
    if M >= 2 * row_mult:
        tm_eff = min(tm_eff, _round_up(-(-M // 2), row_mult))
    M_p = _round_up(M, tm_eff)

    def pad2(a, rr, cc):
        return jnp.pad(a, ((0, rr - a.shape[0]), (0, cc - a.shape[1])))

    # Matmul operands go straight to compute_dtype (no f32 round-trip of x);
    # biases stay f32 for the f32 VPU/EUP epilogue.  Zero padding is exact
    # (gelu(0)=0 and padded up-projection rows are zero).
    x_p = pad2(x.reshape(M, d_in).astype(cdt), M_p, d_in_p)
    w_p = pad2(w.astype(cdt), d_in_p, d_out_p)
    a_p = pad2(lora_a.astype(cdt), d_in_p, r_p)
    lb_p = pad2((lora_scaling * lora_b.astype(jnp.float32)).astype(cdt), r_p, d_out_p)
    b_p = pad2(b.reshape(1, d_out).astype(jnp.float32), 1, d_out_p)
    wd_p = pad2(wd.astype(cdt), d_out_p, d_bot_p)
    bd_p = pad2(bd.reshape(1, d_bot).astype(jnp.float32), 1, d_bot_p)
    wu_p = pad2(wu.astype(cdt), d_bot_p, d_out_p)
    bu_p = pad2(bu.reshape(1, d_out).astype(jnp.float32), 1, d_out_p)

    const = lambda i, k: (0, 0)

    out = pl.pallas_call(
        _mix_layer_kernel,
        out_shape=jax.ShapeDtypeStruct((M_p, d_out_p), out_dtype),
        grid_spec=pltpu.PrefetchScalarGridSpec(
            num_scalar_prefetch=0,
            grid=(M_p // tm_eff, d_in_p // tk_eff),
            in_specs=[
                pl.BlockSpec((tm_eff, tk_eff), lambda i, k: (i, k)),    # x rows (K-tiled)
                pl.BlockSpec((tk_eff, r_p), lambda i, k: (k, 0)),       # LoRA A (K-tiled)
                pl.BlockSpec((tk_eff, d_out_p), lambda i, k: (k, 0)),   # backbone W (K-tiled)
                pl.BlockSpec((1, d_out_p), const),                      # backbone bias (f32)
                pl.BlockSpec((r_p, d_out_p), const),                    # LoRA B (scaling folded)
                pl.BlockSpec((d_out_p, d_bot_p), const),                # adapter down W
                pl.BlockSpec((1, d_bot_p), const),                      # adapter down bias (f32)
                pl.BlockSpec((d_bot_p, d_out_p), const),                # adapter up W
                pl.BlockSpec((1, d_out_p), const),                      # adapter up bias (f32)
            ],
            out_specs=pl.BlockSpec((tm_eff, d_out_p), lambda i, k: (i, 0)),
            scratch_shapes=[
                pltpu.VMEM((tm_eff, d_out_p), jnp.float32),   # backbone+LoRA accumulator
                pltpu.VMEM((tm_eff, r_p), jnp.float32),       # LoRA down-proj accumulator
            ],
        ),
        compiler_params=pltpu.CompilerParams(
            dimension_semantics=("parallel", "arbitrary"),
            vmem_limit_bytes=_vmem_limit_bytes(),
        ),
    )(x_p, a_p, w_p, b_p, lb_p, wd_p, bd_p, wu_p, bu_p)

    return out[:M, :d_out].reshape(B, S, d_out)


def _reference(x, w, b, lora_a, lora_b, lora_scaling, wd, bd, wu, bu):
    y0 = x @ w + b
    lo = lora_scaling * ((x @ lora_a) @ lora_b)
    p = y0 + lo
    ad = jax.nn.gelu(p @ wd + bd, approximate=True) @ wu + bu
    return p + ad


if __name__ == "__main__":
    # Small shapes consistent with the module (Linear backbone on seq data).
    B, S = 2, 8
    d_in = d_out = 32
    lora_r, lora_alpha = 4, 8
    d_bot = 8

    key = jax.random.PRNGKey(0)
    ks = jax.random.split(key, 9)
    x      = jax.random.normal(ks[0], (B, S, d_in), jnp.float32)
    w      = jax.random.normal(ks[1], (d_in, d_out), jnp.float32) * 0.1
    b      = jax.random.normal(ks[2], (d_out,), jnp.float32) * 0.1
    lora_a = jax.random.normal(ks[3], (d_in, lora_r), jnp.float32) * 0.1
    lora_b = jax.random.normal(ks[4], (lora_r, d_out), jnp.float32) * 0.1
    wd     = jax.random.normal(ks[5], (d_out, d_bot), jnp.float32) * 0.1
    bd     = jax.random.normal(ks[6], (d_bot,), jnp.float32) * 0.1
    wu     = jax.random.normal(ks[7], (d_bot, d_out), jnp.float32) * 0.1
    bu     = jax.random.normal(ks[8], (d_out,), jnp.float32) * 0.1

    scaling = lora_alpha / lora_r

    ref = _reference(x, w, b, lora_a, lora_b, scaling, wd, bd, wu, bu)

    # f32 matmul-operand path: tight check vs the unfolded reference.
    out_f32 = mix_layer_parallel(x, w, b, lora_a, lora_b, scaling,
                                 wd, bd, wu, bu, compute_dtype="float32")
    out_f32 = jax.block_until_ready(out_f32)
    assert out_f32.shape == (B, S, d_out)
    assert jnp.allclose(out_f32, ref, rtol=1e-5, atol=1e-5), "f32 mismatch vs reference"

    # Default bf16 MXU-operand path (f32 accumulation + f32 epilogue): loose check.
    out_bf16 = mix_layer_parallel(x, w, b, lora_a, lora_b, scaling,
                                  wd, bd, wu, bu)
    out_bf16 = jax.block_until_ready(out_bf16)
    assert out_bf16.shape == (B, S, d_out)
    assert jnp.allclose(out_bf16.astype(jnp.float32), ref, rtol=5e-2, atol=5e-2), \
        "bf16 mismatch vs reference"

    print("KERNEL_OK")
</pallas_src>

<mosaic_0001>
module attributes {stable_mosaic.version = 11 : i64} {
  func.func @_mix_layer_kernel(%arg0: i32, %arg1: i32, %arg2: memref<8x128xf32, #tpu.memory_space<vmem>>, %arg3: memref<128x128xf32, #tpu.memory_space<vmem>>, %arg4: memref<128x128xf32, #tpu.memory_space<vmem>>, %arg5: memref<1x128xf32, #tpu.memory_space<vmem>>, %arg6: memref<128x128xf32, #tpu.memory_space<vmem>>, %arg7: memref<128x128xf32, #tpu.memory_space<vmem>>, %arg8: memref<1x128xf32, #tpu.memory_space<vmem>>, %arg9: memref<128x128xf32, #tpu.memory_space<vmem>>, %arg10: memref<1x128xf32, #tpu.memory_space<vmem>>, %arg11: memref<8x128xf32, #tpu.memory_space<vmem>>, %arg12: memref<8x128xf32, #tpu.memory_space<vmem>>, %arg13: memref<8x128xf32, #tpu.memory_space<vmem>>) attributes {dimension_semantics = [#tpu.dimension_semantics<parallel>, #tpu.dimension_semantics<arbitrary>], iteration_bounds = array<i64: 2, 1>, scalar_prefetch = 0 : i64, scratch_operands = 2 : i64, tpu.core_type = #tpu.core_type<tc>, window_params = [{transform_indices = @transform_0, window_bounds = array<i64: 8, 128>}, {transform_indices = @transform_1, window_bounds = array<i64: 128, 128>}, {transform_indices = @transform_2, window_bounds = array<i64: 128, 128>}, {pipeline_mode = #tpu.pipeline_mode<synchronous>, transform_indices = @transform_3, window_bounds = array<i64: 1, 128>}, {pipeline_mode = #tpu.pipeline_mode<synchronous>, transform_indices = @transform_4, window_bounds = array<i64: 128, 128>}, {pipeline_mode = #tpu.pipeline_mode<synchronous>, transform_indices = @transform_5, window_bounds = array<i64: 128, 128>}, {pipeline_mode = #tpu.pipeline_mode<synchronous>, transform_indices = @transform_6, window_bounds = array<i64: 1, 128>}, {pipeline_mode = #tpu.pipeline_mode<synchronous>, transform_indices = @transform_7, window_bounds = array<i64: 128, 128>}, {pipeline_mode = #tpu.pipeline_mode<synchronous>, transform_indices = @transform_8, window_bounds = array<i64: 1, 128>}, {transform_indices = @transform_9, window_bounds = array<i64: 8, 128>}]} {
    %c0_i32 = arith.constant 0 : i32
    %0 = arith.cmpi eq, %arg1, %c0_i32 : i32
    %1 = arith.extui %0 : i1 to i32
    %c0_i32_0 = arith.constant 0 : i32
    %2 = arith.cmpi ne, %1, %c0_i32_0 : i32
    scf.if %2 {
      %cst_17 = arith.constant 0.000000e+00 : f32
      %17 = vector.broadcast %cst_17 : f32 to vector<8x128xf32>
      %c0_18 = arith.constant 0 : index
      %c0_19 = arith.constant 0 : index
      %18 = vector.load %arg12[%c0_18, %c0_19] : memref<8x128xf32, #tpu.memory_space<vmem>>, vector<8x128xf32>
      tpu.vector_store %arg12[%c0_18, %c0_19], %17 {strides = array<i32>} : memref<8x128xf32, #tpu.memory_space<vmem>>, vector<8x128xf32>,
      %cst_20 = arith.constant 0.000000e+00 : f32
      %19 = vector.broadcast %cst_20 : f32 to vector<8x128xf32>
      %c0_21 = arith.constant 0 : index
      %c0_22 = arith.constant 0 : index
      %20 = vector.load %arg13[%c0_21, %c0_22] : memref<8x128xf32, #tpu.memory_space<vmem>>, vector<8x128xf32>
      tpu.vector_store %arg13[%c0_21, %c0_22], %19 {strides = array<i32>} : memref<8x128xf32, #tpu.memory_space<vmem>>, vector<8x128xf32>,
    } else {
    }
    %c0 = arith.constant 0 : index
    %c0_1 = arith.constant 0 : index
    %3 = vector.load %arg2[%c0, %c0_1] : memref<8x128xf32, #tpu.memory_space<vmem>>, vector<8x128xf32>
    %c0_2 = arith.constant 0 : index
    %c0_3 = arith.constant 0 : index
    %4 = vector.load %arg12[%c0_2, %c0_3] : memref<8x128xf32, #tpu.memory_space<vmem>>, vector<8x128xf32>
    %c0_4 = arith.constant 0 : index
    %c0_5 = arith.constant 0 : index
    %5 = vector.load %arg4[%c0_4, %c0_5] : memref<128x128xf32, #tpu.memory_space<vmem>>, vector<128x128xf32>
    %cst = arith.constant dense<0.000000e+00> : vector<8x128xf32>
    %6 = tpu.matmul %3, %5, %cst {dimension_numbers = #tpu.dot_dimension_numbers<[1], [0], [0], [1], [0, 0, 1, 1], [], []>} : vector<8x128xf32>, vector<128x128xf32>, vector<8x128xf32> -> vector<8x128xf32>
    %7 = arith.addf %4, %6 : vector<8x128xf32>
    %c0_6 = arith.constant 0 : index
    %c0_7 = arith.constant 0 : index
    %8 = vector.load %arg12[%c0_6, %c0_7] : memref<8x128xf32, #tpu.memory_space<vmem>>, vector<8x128xf32>
    tpu.vector_store %arg12[%c0_6, %c0_7], %7 {strides = array<i32>} : memref<8x128xf32, #tpu.memory_space<vmem>>, vector<8x128xf32>,
    %c0_8 = arith.constant 0 : index
    %c0_9 = arith.constant 0 : index
    %9 = vector.load %arg13[%c0_8, %c0_9] : memref<8x128xf32, #tpu.memory_space<vmem>>, vector<8x128xf32>
    %c0_10 = arith.constant 0 : index
    %c0_11 = arith.constant 0 : index
    %10 = vector.load %arg3[%c0_10, %c0_11] : memref<128x128xf32, #tpu.memory_space<vmem>>, vector<128x128xf32>
    %cst_12 = arith.constant dense<0.000000e+00> : vector<8x128xf32>
    %11 = tpu.matmul %3, %10, %cst_12 {dimension_numbers = #tpu.dot_dimension_numbers<[1], [0], [0], [1], [0, 0, 1, 1], [], []>} : vector<8x128xf32>, vector<128x128xf32>, vector<8x128xf32> -> vector<8x128xf32>
    %12 = arith.addf %9, %11 : vector<8x128xf32>
    %c0_13 = arith.constant 0 : index
    %c0_14 = arith.constant 0 : index
    %13 = vector.load %arg13[%c0_13, %c0_14] : memref<8x128xf32, #tpu.memory_space<vmem>>, vector<8x128xf32>
    tpu.vector_store %arg13[%c0_13, %c0_14], %12 {strides = array<i32>} : memref<8x128xf32, #tpu.memory_space<vmem>>, vector<8x128xf32>,
    %c0_i32_15 = arith.constant 0 : i32
    %14 = arith.cmpi eq, %arg1, %c0_i32_15 : i32
    %15 = arith.extui %14 : i1 to i32
    %c0_i32_16 = arith.constant 0 : i32
    %16 = arith.cmpi ne, %15, %c0_i32_16 : i32
    scf.if %16 {
      %c0_17 = arith.constant 0 : index
      %c0_18 = arith.constant 0 : index
      %17 = vector.load %arg13[%c0_17, %c0_18] : memref<8x128xf32, #tpu.memory_space<vmem>>, vector<8x128xf32>
      %c0_19 = arith.constant 0 : index
      %c0_20 = arith.constant 0 : index
      %18 = vector.load %arg6[%c0_19, %c0_20] : memref<128x128xf32, #tpu.memory_space<vmem>>, vector<128x128xf32>
      %cst_21 = arith.constant dense<0.000000e+00> : vector<8x128xf32>
      %19 = tpu.matmul %17, %18, %cst_21 {dimension_numbers = #tpu.dot_dimension_numbers<[1], [0], [0], [1], [0, 0, 1, 1], [], []>} : vector<8x128xf32>, vector<128x128xf32>, vector<8x128xf32> -> vector<8x128xf32>
      %c0_22 = arith.constant 0 : index
      %c0_23 = arith.constant 0 : index
      %20 = vector.load %arg12[%c0_22, %c0_23] : memref<8x128xf32, #tpu.memory_space<vmem>>, vector<8x128xf32>
      %21 = arith.addf %20, %19 : vector<8x128xf32>
      %c0_24 = arith.constant 0 : index
      %c0_25 = arith.constant 0 : index
      %22 = vector.load %arg5[%c0_24, %c0_25] : memref<1x128xf32, #tpu.memory_space<vmem>>, vector<1x128xf32>
      %23 = vector.broadcast %22 : vector<1x128xf32> to vector<8x128xf32>
      %24 = arith.addf %21, %23 : vector<8x128xf32>
      %c0_26 = arith.constant 0 : index
      %c0_27 = arith.constant 0 : index
      %25 = vector.load %arg7[%c0_26, %c0_27] : memref<128x128xf32, #tpu.memory_space<vmem>>, vector<128x128xf32>
      %cst_28 = arith.constant dense<0.000000e+00> : vector<8x128xf32>
      %26 = tpu.matmul %24, %25, %cst_28 {dimension_numbers = #tpu.dot_dimension_numbers<[1], [0], [0], [1], [0, 0, 1, 1], [], []>} : vector<8x128xf32>, vector<128x128xf32>, vector<8x128xf32> -> vector<8x128xf32>
      %c0_29 = arith.constant 0 : index
      %c0_30 = arith.constant 0 : index
      %27 = vector.load %arg8[%c0_29, %c0_30] : memref<1x128xf32, #tpu.memory_space<vmem>>, vector<1x128xf32>
      %28 = vector.broadcast %27 : vector<1x128xf32> to vector<8x128xf32>
      %29 = arith.addf %26, %28 : vector<8x128xf32>
      %30 = arith.mulf %29, %29 : vector<8x128xf32>
      %31 = arith.mulf %29, %30 : vector<8x128xf32>
      %cst_31 = arith.constant 4.471500e-02 : f32
      %32 = vector.broadcast %cst_31 : f32 to vector<8x128xf32>
      %33 = arith.mulf %32, %31 : vector<8x128xf32>
      %34 = arith.addf %29, %33 : vector<8x128xf32>
      %cst_32 = arith.constant 0.797884583 : f32
      %35 = vector.broadcast %cst_32 : f32 to vector<8x128xf32>
      %36 = arith.mulf %35, %34 : vector<8x128xf32>
      %37 = math.tanh %36 : vector<8x128xf32>
      %cst_33 = arith.constant 1.000000e+00 : f32
      %38 = vector.broadcast %cst_33 : f32 to vector<8x128xf32>
      %39 = arith.addf %38, %37 : vector<8x128xf32>
      %cst_34 = arith.constant 5.000000e-01 : f32
      %40 = vector.broadcast %cst_34 : f32 to vector<8x128xf32>
      %41 = arith.mulf %40, %39 : vector<8x128xf32>
      %42 = arith.mulf %29, %41 : vector<8x128xf32>
      %c0_35 = arith.constant 0 : index
      %c0_36 = arith.constant 0 : index
      %43 = vector.load %arg9[%c0_35, %c0_36] : memref<128x128xf32, #tpu.memory_space<vmem>>, vector<128x128xf32>
      %cst_37 = arith.constant dense<0.000000e+00> : vector<8x128xf32>
      %44 = tpu.matmul %42, %43, %cst_37 {dimension_numbers = #tpu.dot_dimension_numbers<[1], [0], [0], [1], [0, 0, 1, 1], [], []>} : vector<8x128xf32>, vector<128x128xf32>, vector<8x128xf32> -> vector<8x128xf32>
      %c0_38 = arith.constant 0 : index
      %c0_39 = arith.constant 0 : index
      %45 = vector.load %arg10[%c0_38, %c0_39] : memref<1x128xf32, #tpu.memory_space<vmem>>, vector<1x128xf32>
      %46 = vector.broadcast %45 : vector<1x128xf32> to vector<8x128xf32>
      %47 = arith.addf %44, %46 : vector<8x128xf32>
      %48 = arith.addf %24, %47 : vector<8x128xf32>
      %c0_40 = arith.constant 0 : index
      %c0_41 = arith.constant 0 : index
      %49 = vector.load %arg11[%c0_40, %c0_41] : memref<8x128xf32, #tpu.memory_space<vmem>>, vector<8x128xf32>
      tpu.vector_store %arg11[%c0_40, %c0_41], %48 {strides = array<i32>} : memref<8x128xf32, #tpu.memory_space<vmem>>, vector<8x128xf32>,
    } else {
    }
    return
  }
  func.func @transform_0(%arg0: i32, %arg1: i32) -> (i32, i32) {
    %c0_i32 = arith.constant 0 : i32
    return %arg0, %arg1 : i32, i32
  }
  func.func @transform_1(%arg0: i32, %arg1: i32) -> (i32, i32) {
    %c0_i32 = arith.constant 0 : i32
    %c0_i32_0 = arith.constant 0 : i32
    return %arg1, %c0_i32 : i32, i32
  }
  func.func @transform_2(%arg0: i32, %arg1: i32) -> (i32, i32) {
    %c0_i32 = arith.constant 0 : i32
    %c0_i32_0 = arith.constant 0 : i32
    return %arg1, %c0_i32 : i32, i32
  }
  func.func @transform_3(%arg0: i32, %arg1: i32) -> (i32, i32) {
    %c0_i32 = arith.constant 0 : i32
    %c0_i32_0 = arith.constant 0 : i32
    %c0_i32_1 = arith.constant 0 : i32
    return %c0_i32, %c0_i32_0 : i32, i32
  }
  func.func @transform_4(%arg0: i32, %arg1: i32) -> (i32, i32) {
    %c0_i32 = arith.constant 0 : i32
    %c0_i32_0 = arith.constant 0 : i32
    %c0_i32_1 = arith.constant 0 : i32
    return %c0_i32, %c0_i32_0 : i32, i32
  }
  func.func @transform_5(%arg0: i32, %arg1: i32) -> (i32, i32) {
    %c0_i32 = arith.constant 0 : i32
    %c0_i32_0 = arith.constant 0 : i32
    %c0_i32_1 = arith.constant 0 : i32
    return %c0_i32, %c0_i32_0 : i32, i32
  }
  func.func @transform_6(%arg0: i32, %arg1: i32) -> (i32, i32) {
    %c0_i32 = arith.constant 0 : i32
    %c0_i32_0 = arith.constant 0 : i32
    %c0_i32_1 = arith.constant 0 : i32
    return %c0_i32, %c0_i32_0 : i32, i32
  }
  func.func @transform_7(%arg0: i32, %arg1: i32) -> (i32, i32) {
    %c0_i32 = arith.constant 0 : i32
    %c0_i32_0 = arith.constant 0 : i32
    %c0_i32_1 = arith.constant 0 : i32
    return %c0_i32, %c0_i32_0 : i32, i32
  }
  func.func @transform_8(%arg0: i32, %arg1: i32) -> (i32, i32) {
    %c0_i32 = arith.constant 0 : i32
    %c0_i32_0 = arith.constant 0 : i32
    %c0_i32_1 = arith.constant 0 : i32
    return %c0_i32, %c0_i32_0 : i32, i32
  }
  func.func @transform_9(%arg0: i32, %arg1: i32) -> (i32, i32) {
    %c0_i32 = arith.constant 0 : i32
    %c0_i32_0 = arith.constant 0 : i32
    return %arg0, %c0_i32 : i32, i32
  }
}

</mosaic_0001>

<llo_original>
// kernel: mix_layer_parallel.1
$region0: #{mix_layer_parallel.1}
  #allocation0 [shape = 'u32[]', space=smem, size = 0x4, offset = 0x4, fixed_abs, tag = 'smem constant byte address 0x4 - core index']
  #allocation1 [shape = 'u32[144,128]{1,0:T(1,128)}', space=vmem, size = 0x12000, scoped, tag = 'internal scratch']
  #allocation2 [shape = 'f32[8,128]{1,0:T(8,128)}', space=vmem, size = 0x1000, scoped, tag = 'scratch operand']
  #allocation3 [shape = 'f32[8,128]{1,0:T(8,128)}', space=vmem, size = 0x1000, scoped, tag = 'scratch operand']
  %s0 = inlined_call_operand.vmem [shape: f32[16,128], index: 0, kind: input, shape index: {}]
  %s1 = inlined_call_operand.vmem [shape: f32[128,128], index: 1, kind: input, shape index: {}]
  %s2 = inlined_call_operand.vmem [shape: f32[128,128], index: 2, kind: input, shape index: {}]
  %s3 = inlined_call_operand.vmem [shape: f32[1,128], index: 3, kind: input, shape index: {}]
  %s4 = inlined_call_operand.vmem [shape: f32[128,128], index: 4, kind: input, shape index: {}]
  %s5 = inlined_call_operand.vmem [shape: f32[128,128], index: 5, kind: input, shape index: {}]
  %s6 = inlined_call_operand.vmem [shape: f32[1,128], index: 6, kind: input, shape index: {}]
  %s7 = inlined_call_operand.vmem [shape: f32[128,128], index: 7, kind: input, shape index: {}]
  %s8 = inlined_call_operand.vmem [shape: f32[1,128], index: 8, kind: input, shape index: {}]
  %s9 = inlined_call_operand.vmem [shape: f32[16,128], index: 9, kind: output, shape index: {}]
  %s10 = sld [smem:[#allocation0]]
  $region77: #{mix_layer_parallel.1} parent=0
    _
  %s12 = ssub.s32 1, %s10
  %s13 = scalar_select 0, %s12, %s10
  loop: start=0, step=1, limit=4
  $region2: #{mix_layer_parallel.1} parent=0 // loop_pre_header
    _
  $region3: #{mix_layer_parallel.1} parent=0 // loop_header
    %s15 = sphi 0, %s19
    %p16 = scmp.ge.s32.totalorder %s15, 4
    %s22 = sphi 0, %s34
    %s23 = sphi 0, %s30
    %s24 = sphi 0, %s22
    %s25 = sphi 0, %s23
    %s26 = sphi 0, %s24
    %s27 = sphi 0, %s25
    %s39 = sphi 0, %s41
    %s42 = sphi 0, %s39
    %s43 = sphi 0, %s42
    %s59 = sphi 0, %s43
    %s65 = sphi 0, %s67
    %s68 = sphi 0, %s65
    %s69 = sphi 0, %s68
    %s85 = sphi 0, %s69
    %s91 = sphi 0, %s93
    %s94 = sphi 0, %s91
    %s95 = sphi 0, %s94
    %s111 = sphi 0, %s95
    %s115 = sphi 0, %s115
    %s117 = sphi 0, %s115
    %s118 = sphi 0, %s117
    %s132 = sphi 0, %s118
    %s136 = sphi 0, %s136
    %s138 = sphi 0, %s136
    %s139 = sphi 0, %s138
    %s153 = sphi 0, %s139
    %s157 = sphi 0, %s157
    %s159 = sphi 0, %s157
    %s160 = sphi 0, %s159
    %s174 = sphi 0, %s160
    %s178 = sphi 0, %s178
    %s180 = sphi 0, %s178
    %s181 = sphi 0, %s180
    %s195 = sphi 0, %s181
    %s199 = sphi 0, %s199
    %s201 = sphi 0, %s199
    %s202 = sphi 0, %s201
    %s216 = sphi 0, %s202
    %s220 = sphi 0, %s220
    %s222 = sphi 0, %s220
    %s223 = sphi 0, %s222
    %s237 = sphi 0, %s223
    %s243 = sphi 0, %s245
    %s246 = sphi 0, %s243
    %s247 = sphi 0, %s246
    %s263 = sphi 0, %s247
  $region4: #{mix_layer_parallel.1} parent=0 // loop_header_branch
    %18 = sbr.rel (%p16) target = $region8
  $region5: #{mix_layer_parallel.1} parent=0 // loop_body
    %s20 = ssub.s32 %s15, 1
    %s21 = ssub.s32 %s15, 2
    %s28 = sadd.s32 1, %s23
    %p29 = scmp.ge.s32.totalorder %s28, 1
    %s30 = scalar_select %p29, 0, %s28
    %s31 = sadd.s32 1, %s22
    %s32 = scalar_select %p29, %s31, %s22
    %p33 = scmp.ge.s32.totalorder %s32, 2
    %s34 = scalar_select %p33, 0, %s32
    %s35 = ssub.s32 %s22, %s34
    %s36 = ssub.s32 %s23, %s30
    %s37 = sor.u32 %s35, %s36
    %p38 = scmp.eq.s32.totalorder %s37, 0
    %s40 = sadd.s32 %s39, 1
    %s41 = scalar_select %p38, %s39, %s40
    %p44 = pneg %p38
    %p45 = scmp.eq.s32.totalorder %s15, 1
    %p46 = por %p44, %p45
    %p47 = scmp.ne.s32.totalorder %s39, %s42
    %p48 = scmp.eq.s32.totalorder %s15, 0
    %p49 = por %p47, %p48
    %p50 = scmp.ne.s32.totalorder %s39, %s42
    %p51 = scmp.eq.s32.totalorder %s20, 1
    %p52 = por %p50, %p51
    %p53 = scmp.ne.s32.totalorder %s42, %s43
    %p54 = scmp.eq.s32.totalorder %s20, 0
    %p55 = por %p53, %p54
    %p56 = scmp.ne.s32.totalorder %s42, %s43
    %p57 = scmp.eq.s32.totalorder %s21, 1
    %p58 = por %p56, %p57
    %p60 = scmp.ne.s32.totalorder %s43, %s59
    %p61 = scmp.eq.s32.totalorder %s21, 0
    %p62 = por %p60, %p61
    %s63 = ssub.s32 %s23, %s30
    %p64 = scmp.eq.s32.totalorder %s63, 0
    %s66 = sadd.s32 %s65, 1
    %s67 = scalar_select %p64, %s65, %s66
    %p70 = pneg %p64
    %p71 = scmp.eq.s32.totalorder %s15, 1
    %p72 = por %p70, %p71
    %p73 = scmp.ne.s32.totalorder %s65, %s68
    %p74 = scmp.eq.s32.totalorder %s15, 0
    %p75 = por %p73, %p74
    %p76 = scmp.ne.s32.totalorder %s65, %s68
    %p77 = scmp.eq.s32.totalorder %s20, 1
    %p78 = por %p76, %p77
    %p79 = scmp.ne.s32.totalorder %s68, %s69
    %p80 = scmp.eq.s32.totalorder %s20, 0
    %p81 = por %p79, %p80
    %p82 = scmp.ne.s32.totalorder %s68, %s69
    %p83 = scmp.eq.s32.totalorder %s21, 1
    %p84 = por %p82, %p83
    %p86 = scmp.ne.s32.totalorder %s69, %s85
    %p87 = scmp.eq.s32.totalorder %s21, 0
    %p88 = por %p86, %p87
    %s89 = ssub.s32 %s23, %s30
    %p90 = scmp.eq.s32.totalorder %s89, 0
    %s92 = sadd.s32 %s91, 1
    %s93 = scalar_select %p90, %s91, %s92
    %p96 = pneg %p90
    %p97 = scmp.eq.s32.totalorder %s15, 1
    %p98 = por %p96, %p97
    %p99 = scmp.ne.s32.totalorder %s91, %s94
    %p100 = scmp.eq.s32.totalorder %s15, 0
    %p101 = por %p99, %p100
    %p102 = scmp.ne.s32.totalorder %s91, %s94
    %p103 = scmp.eq.s32.totalorder %s20, 1
    %p104 = por %p102, %p103
    %p105 = scmp.ne.s32.totalorder %s94, %s95
    %p106 = scmp.eq.s32.totalorder %s20, 0
    %p107 = por %p105, %p106
    %p108 = scmp.ne.s32.totalorder %s94, %s95
    %p109 = scmp.eq.s32.totalorder %s21, 1
    %p110 = por %p108, %p109
    %p112 = scmp.ne.s32.totalorder %s95, %s111
    %p113 = scmp.eq.s32.totalorder %s21, 0
    %p114 = por %p112, %p113
    %s116 = sadd.s32 %s115, 1
    %p119 = scmp.eq.s32.totalorder %s15, 1
    %p120 = scmp.ne.s32.totalorder %s115, %s117
    %p121 = scmp.eq.s32.totalorder %s15, 0
    %p122 = por %p120, %p121
    %p123 = scmp.ne.s32.totalorder %s115, %s117
    %p124 = scmp.eq.s32.totalorder %s20, 1
    %p125 = por %p123, %p124
    %p126 = scmp.ne.s32.totalorder %s117, %s118
    %p127 = scmp.eq.s32.totalorder %s20, 0
    %p128 = por %p126, %p127
    %p129 = scmp.ne.s32.totalorder %s117, %s118
    %p130 = scmp.eq.s32.totalorder %s21, 1
    %p131 = por %p129, %p130
    %p133 = scmp.ne.s32.totalorder %s118, %s132
    %p134 = scmp.eq.s32.totalorder %s21, 0
    %p135 = por %p133, %p134
    %s137 = sadd.s32 %s136, 1
    %p140 = scmp.eq.s32.totalorder %s15, 1
    %p141 = scmp.ne.s32.totalorder %s136, %s138
    %p142 = scmp.eq.s32.totalorder %s15, 0
    %p143 = por %p141, %p142
    %p144 = scmp.ne.s32.totalorder %s136, %s138
    %p145 = scmp.eq.s32.totalorder %s20, 1
    %p146 = por %p144, %p145
    %p147 = scmp.ne.s32.totalorder %s138, %s139
    %p148 = scmp.eq.s32.totalorder %s20, 0
    %p149 = por %p147, %p148
    %p150 = scmp.ne.s32.totalorder %s138, %s139
    %p151 = scmp.eq.s32.totalorder %s21, 1
    %p152 = por %p150, %p151
    %p154 = scmp.ne.s32.totalorder %s139, %s153
    %p155 = scmp.eq.s32.totalorder %s21, 0
    %p156 = por %p154, %p155
    %s158 = sadd.s32 %s157, 1
    %p161 = scmp.eq.s32.totalorder %s15, 1
    %p162 = scmp.ne.s32.totalorder %s157, %s159
    %p163 = scmp.eq.s32.totalorder %s15, 0
    %p164 = por %p162, %p163
    %p165 = scmp.ne.s32.totalorder %s157, %s159
    %p166 = scmp.eq.s32.totalorder %s20, 1
    %p167 = por %p165, %p166
    %p168 = scmp.ne.s32.totalorder %s159, %s160
    %p169 = scmp.eq.s32.totalorder %s20, 0
    %p170 = por %p168, %p169
    %p171 = scmp.ne.s32.totalorder %s159, %s160
    %p172 = scmp.eq.s32.totalorder %s21, 1
    %p173 = por %p171, %p172
    %p175 = scmp.ne.s32.totalorder %s160, %s174
    %p176 = scmp.eq.s32.totalorder %s21, 0
    %p177 = por %p175, %p176
    %s179 = sadd.s32 %s178, 1
    %p182 = scmp.eq.s32.totalorder %s15, 1
    %p183 = scmp.ne.s32.totalorder %s178, %s180
    %p184 = scmp.eq.s32.totalorder %s15, 0
    %p185 = por %p183, %p184
    %p186 = scmp.ne.s32.totalorder %s178, %s180
    %p187 = scmp.eq.s32.totalorder %s20, 1
    %p188 = por %p186, %p187
    %p189 = scmp.ne.s32.totalorder %s180, %s181
    %p190 = scmp.eq.s32.totalorder %s20, 0
    %p191 = por %p189, %p190
    %p192 = scmp.ne.s32.totalorder %s180, %s181
    %p193 = scmp.eq.s32.totalorder %s21, 1
    %p194 = por %p192, %p193
    %p196 = scmp.ne.s32.totalorder %s181, %s195
    %p197 = scmp.eq.s32.totalorder %s21, 0
    %p198 = por %p196, %p197
    %s200 = sadd.s32 %s199, 1
    %p203 = scmp.eq.s32.totalorder %s15, 1
    %p204 = scmp.ne.s32.totalorder %s199, %s201
    %p205 = scmp.eq.s32.totalorder %s15, 0
    %p206 = por %p204, %p205
    %p207 = scmp.ne.s32.totalorder %s199, %s201
    %p208 = scmp.eq.s32.totalorder %s20, 1
    %p209 = por %p207, %p208
    %p210 = scmp.ne.s32.totalorder %s201, %s202
    %p211 = scmp.eq.s32.totalorder %s20, 0
    %p212 = por %p210, %p211
    %p213 = scmp.ne.s32.totalorder %s201, %s202
    %p214 = scmp.eq.s32.totalorder %s21, 1
    %p215 = por %p213, %p214
    %p217 = scmp.ne.s32.totalorder %s202, %s216
    %p218 = scmp.eq.s32.totalorder %s21, 0
    %p219 = por %p217, %p218
    %s221 = sadd.s32 %s220, 1
    %p224 = scmp.eq.s32.totalorder %s15, 1
    %p225 = scmp.ne.s32.totalorder %s220, %s222
    %p226 = scmp.eq.s32.totalorder %s15, 0
    %p227 = por %p225, %p226
    %p228 = scmp.ne.s32.totalorder %s220, %s222
    %p229 = scmp.eq.s32.totalorder %s20, 1
    %p230 = por %p228, %p229
    %p231 = scmp.ne.s32.totalorder %s222, %s223
    %p232 = scmp.eq.s32.totalorder %s20, 0
    %p233 = por %p231, %p232
    %p234 = scmp.ne.s32.totalorder %s222, %s223
    %p235 = scmp.eq.s32.totalorder %s21, 1
    %p236 = por %p234, %p235
    %p238 = scmp.ne.s32.totalorder %s223, %s237
    %p239 = scmp.eq.s32.totalorder %s21, 0
    %p240 = por %p238, %p239
    %s241 = ssub.s32 %s22, %s34
    %p242 = scmp.eq.s32.totalorder %s241, 0
    %s244 = sadd.s32 %s243, 1
    %s245 = scalar_select %p242, %s243, %s244
    %p248 = pneg %p242
    %p249 = scmp.eq.s32.totalorder %s15, 1
    %p250 = por %p248, %p249
    %p251 = scmp.ne.s32.totalorder %s243, %s246
    %p252 = scmp.eq.s32.totalorder %s15, 0
    %p253 = por %p251, %p252
    %p254 = scmp.ne.s32.totalorder %s243, %s246
    %p255 = scmp.eq.s32.totalorder %s20, 1
    %p256 = por %p254, %p255
    %p257 = scmp.ne.s32.totalorder %s246, %s247
    %p258 = scmp.eq.s32.totalorder %s20, 0
    %p259 = por %p257, %p258
    %p260 = scmp.ne.s32.totalorder %s246, %s247
    %p261 = scmp.eq.s32.totalorder %s21, 1
    %p262 = por %p260, %p261
    %p264 = scmp.ne.s32.totalorder %s247, %s263
    %p265 = scmp.eq.s32.totalorder %s21, 0
    %p266 = por %p264, %p265
    %p267 = scmp.le.s32.totalorder 1, %s15
    %p268 = scmp.lt.s32.totalorder %s15, 3
    %p269 = pnand %p267, %p268
    %p270 = pneg %p269
    // Predicated region
    $region9: #{mix_layer_parallel.1} parent=5 // pred_check
      _
    $region10: #{mix_layer_parallel.1} parent=5 // pred_check_branch
      %272 = sbr.rel (%p269) target = $region12
    $region11: #{mix_layer_parallel.1} parent=5 // pred_region
      %s273 = ssub.s32 %s15, 1
      // Predicated region
      $region13: #{mix_layer_parallel.1} parent=11 // pred_check
        %p274 = pneg %p81
      $region14: #{mix_layer_parallel.1} parent=11 // pred_check_branch
        %276 = sbr.rel (%p274) target = $region16
      $region15: #{mix_layer_parallel.1} parent=11 // pred_region
        %s277 = smul.u32 16, %s25
        %p278 = scmp.lt.s32.totalorder %s277, 15
        %s279 = scalar_select %p278, %s277, 15
        %s280 = smul.addr %s279, 8
        %s281 = scalar_lea.vmem %s1, %s280
        %s282 = smul.u32 16, %s25
      $region16: #{mix_layer_parallel.1} parent=11 // pred_fallthru
        _
      // Predicated region
      $region17: #{mix_layer_parallel.1} parent=11 // pred_check
        %p283 = pneg %p107
      $region18: #{mix_layer_parallel.1} parent=11 // pred_check_branch
        %285 = sbr.rel (%p283) target = $region20
      $region19: #{mix_layer_parallel.1} parent=11 // pred_region
        %s286 = smul.u32 16, %s25
        %p287 = scmp.lt.s32.totalorder %s286, 15
        %s288 = scalar_select %p287, %s286, 15
        %s289 = smul.addr %s288, 8
        %s290 = scalar_lea.vmem %s2, %s289
        %s291 = smul.u32 16, %s25
      $region20: #{mix_layer_parallel.1} parent=11 // pred_fallthru
        _
      // Predicated region
      $region21: #{mix_layer_parallel.1} parent=11 // pred_check
        %p292 = pneg %p128
      $region22: #{mix_layer_parallel.1} parent=11 // pred_check_branch
        %294 = sbr.rel (%p292) target = $region24
      $region23: #{mix_layer_parallel.1} parent=11 // pred_region
        _
      $region24: #{mix_layer_parallel.1} parent=11 // pred_fallthru
        _
      // Predicated region
      $region25: #{mix_layer_parallel.1} parent=11 // pred_check
        %p295 = pneg %p149
      $region26: #{mix_layer_parallel.1} parent=11 // pred_check_branch
        %297 = sbr.rel (%p295) target = $region28
      $region27: #{mix_layer_parallel.1} parent=11 // pred_region
        _
      $region28: #{mix_layer_parallel.1} parent=11 // pred_fallthru
        _
      // Predicated region
      $region29: #{mix_layer_parallel.1} parent=11 // pred_check
        %p298 = pneg %p170
      $region30: #{mix_layer_parallel.1} parent=11 // pred_check_branch
        %300 = sbr.rel (%p298) target = $region32
      $region31: #{mix_layer_parallel.1} parent=11 // pred_region
        _
      $region32: #{mix_layer_parallel.1} parent=11 // pred_fallthru
        _
      // Predicated region
      $region33: #{mix_layer_parallel.1} parent=11 // pred_check
        %p301 = pneg %p191
      $region34: #{mix_layer_parallel.1} parent=11 // pred_check_branch
        %303 = sbr.rel (%p301) target = $region36
      $region35: #{mix_layer_parallel.1} parent=11 // pred_region
        _
      $region36: #{mix_layer_parallel.1} parent=11 // pred_fallthru
        _
      // Predicated region
      $region37: #{mix_layer_parallel.1} parent=11 // pred_check
        %p304 = pneg %p212
      $region38: #{mix_layer_parallel.1} parent=11 // pred_check_branch
        %306 = sbr.rel (%p304) target = $region40
      $region39: #{mix_layer_parallel.1} parent=11 // pred_region
        _
      $region40: #{mix_layer_parallel.1} parent=11 // pred_fallthru
        _
      // Predicated region
      $region41: #{mix_layer_parallel.1} parent=11 // pred_check
        %p307 = pneg %p233
      $region42: #{mix_layer_parallel.1} parent=11 // pred_check_branch
        %309 = sbr.rel (%p307) target = $region44
      $region43: #{mix_layer_parallel.1} parent=11 // pred_region
        _
      $region44: #{mix_layer_parallel.1} parent=11 // pred_fallthru
        _
    $region12: #{mix_layer_parallel.1} parent=5 // pred_fallthru
      _
    %p310 = scmp.lt.s32.totalorder %s15, 2
    // Predicated region
    $region45: #{mix_layer_parallel.1} parent=5 // pred_check
      %p311 = pneg %p310
    $region46: #{mix_layer_parallel.1} parent=5 // pred_check_branch
      %313 = sbr.rel (%p311) target = $region48
    $region47: #{mix_layer_parallel.1} parent=5 // pred_region
      // Predicated region
      $region49: #{mix_layer_parallel.1} parent=47 // pred_check
        %p314 = pneg %p49
      $region50: #{mix_layer_parallel.1} parent=47 // pred_check_branch
        %316 = sbr.rel (%p314) target = $region52
      $region51: #{mix_layer_parallel.1} parent=47 // pred_region
        %p317 = scmp.lt.s32.totalorder %s22, 1
        %s318 = scalar_select %p317, %s22, 1
        %p319 = scmp.lt.s32.totalorder %s23, 0
        %s320 = scalar_select %p319, %s23, 0
        %s321 = sadd.s32 %s320, %s318
        %s322 = smul.addr %s321, 8
        %s323 = scalar_lea.vmem %s0, %s322
      $region52: #{mix_layer_parallel.1} parent=47 // pred_fallthru
        _
    $region48: #{mix_layer_parallel.1} parent=5 // pred_fallthru
      _
    %p324 = scmp.le.s32.totalorder 1, %s15
    %p325 = scmp.lt.s32.totalorder %s15, 3
    %p326 = pnand %p324, %p325
    %p327 = pneg %p326
    // Predicated region
    $region53: #{mix_layer_parallel.1} parent=5 // pred_check
      _
    $region54: #{mix_layer_parallel.1} parent=5 // pred_check_branch
      %329 = sbr.rel (%p326) target = $region56
    $region55: #{mix_layer_parallel.1} parent=5 // pred_region
      %s330 = ssub.s32 %s15, 1
      %p331 = scmp.lt.s32.totalorder %s24, 1
      %s332 = scalar_select %p331, %s24, 1
      %p333 = scmp.lt.s32.totalorder %s25, 0
      %s334 = scalar_select %p333, %s25, 0
      %s335 = sadd.s32 %s334, %s332
      %s336 = smul.addr %s335, 8
      %s337 = scalar_lea.vmem %s0, %s336
      %p338 = pneg %p55
      %p339 = pneg %p52
      %s340 = smul.u32 16, %s25
      %p341 = scmp.lt.s32.totalorder %s340, 15
      %s342 = scalar_select %p341, %s340, 15
      %s343 = smul.addr %s342, 8
      %s344 = scalar_lea.vmem %s1, %s343
      %p345 = pneg %p81
      %p346 = pneg %p78
      %s347 = smul.u32 16, %s25
      %p348 = scmp.lt.s32.totalorder %s347, 15
      %s349 = scalar_select %p348, %s347, 15
      %s350 = smul.addr %s349, 8
      %s351 = scalar_lea.vmem %s2, %s350
      %p352 = pneg %p107
      %p353 = pneg %p104
      %p354 = pneg %p128
      %p355 = pneg %p125
      %p356 = pneg %p149
      %p357 = pneg %p146
      %p358 = pneg %p170
      %p359 = pneg %p167
      %p360 = pneg %p191
      %p361 = pneg %p188
      %p362 = pneg %p212
      %p363 = pneg %p209
      %p364 = pneg %p233
      %p365 = pneg %p230
      %p366 = pneg %p259
      %p367 = pneg %p256
      %p368 = scmp.lt.s32.totalorder %s24, 1
      %s369 = scalar_select %p368, %s24, 1
      %s370 = smul.addr %s369, 8
      %s371 = scalar_lea.vmem %s9, %s370
      %p372 = scmp.lt.s32.totalorder %s24, 1
      %s373 = scalar_select %p372, %s24, 1
      %p374 = scmp.lt.s32.totalorder %s25, 0
      %s375 = scalar_select %p374, %s25, 0
      %s376 = sadd.s32 %s375, %s373
      %s377 = smul.addr %s376, 8
      %s378 = scalar_lea.vmem %s0, %s377
      %s379 = smul.u32 16, %s25
      %p380 = scmp.lt.s32.totalorder %s379, 15
      %s381 = scalar_select %p380, %s379, 15
      %s382 = smul.addr %s381, 8
      %s383 = scalar_lea.vmem %s1, %s382
      %s384 = smul.u32 16, %s25
      %s385 = smul.u32 16, %s25
      %p386 = scmp.lt.s32.totalorder %s385, 15
      %s387 = scalar_select %p386, %s385, 15
      %s388 = smul.addr %s387, 8
      %s389 = scalar_lea.vmem %s2, %s388
      %s390 = smul.u32 16, %s25
      %p391 = scmp.lt.s32.totalorder %s24, 1
      %s392 = scalar_select %p391, %s24, 1
      %s393 = smul.addr %s392, 8
      %s394 = scalar_lea.vmem %s9, %s393
      %p395 = scmp.eq.s32.totalorder %s25, 0
      // Predicated region
      $region57: #{mix_layer_parallel.1} parent=55 // pred_check
        %p396 = pneg %p395
      $region58: #{mix_layer_parallel.1} parent=55 // pred_check_branch
        %398 = sbr.rel (%p396) target = $region60
      $region59: #{mix_layer_parallel.1} parent=55 // pred_region
        %399 = vst [vmem:[#allocation2] sm:$0xff] 0.0
        %400 = vst [vmem:[#allocation3] sm:$0xff] 0.0
      $region60: #{mix_layer_parallel.1} parent=55 // pred_fallthru
        _
      %v401 = vld [vmem:[%s378] sm:$0xff]
      %v402 = vld [vmem:[#allocation2] sm:$0xff]
      %v403 = vld [vmem:[%s389] sm:$0xff]
      %v404 = vld [vmem:[%s389 + $0x8] sm:$0xff]
      %v405 = vld [vmem:[%s389 + $0x10] sm:$0xff]
      %v406 = vld [vmem:[%s389 + $0x18] sm:$0xff]
      %v407 = vld [vmem:[%s389 + $0x20] sm:$0xff]
      %v408 = vld [vmem:[%s389 + $0x28] sm:$0xff]
      %v409 = vld [vmem:[%s389 + $0x30] sm:$0xff]
      %v410 = vld [vmem:[%s389 + $0x38] sm:$0xff]
      %v411 = vld [vmem:[%s389 + $0x40] sm:$0xff]
      %v412 = vld [vmem:[%s389 + $0x48] sm:$0xff]
      %v413 = vld [vmem:[%s389 + $0x50] sm:$0xff]
      %v414 = vld [vmem:[%s389 + $0x58] sm:$0xff]
      %v415 = vld [vmem:[%s389 + $0x60] sm:$0xff]
      %v416 = vld [vmem:[%s389 + $0x68] sm:$0xff]
      %v417 = vld [vmem:[%s389 + $0x70] sm:$0xff]
      %v418 = vld [vmem:[%s389 + $0x78] sm:$0xff]
      %419 = vmatprep.subr.mxu0 0.0
      %420 = vmatpush1.msra.mxu0 %v403
      %421 = vmatprep.subr.mxu0 0.0
      %422 = vmatpush1.msra.mxu0 %v404
      %423 = vmatprep.subr.mxu0 0.0
      %424 = vmatpush1.msra.mxu0 %v405
      %425 = vmatprep.subr.mxu0 0.0
      %426 = vmatpush1.msra.mxu0 %v406
      %427 = vmatprep.subr.mxu0 0.0
      %428 = vmatpush1.msra.mxu0 %v407
      %429 = vmatprep.subr.mxu0 0.0
      %430 = vmatpush1.msra.mxu0 %v408
      %431 = vmatprep.subr.mxu0 0.0
      %432 = vmatpush1.msra.mxu0 %v409
      %433 = vmatprep.subr.mxu0 0.0
      %434 = vmatpush1.msra.mxu0 %v410
      %435 = vmatprep.subr.mxu0 0.0
      %436 = vmatpush1.msra.mxu0 %v411
      %437 = vmatprep.subr.mxu0 0.0
      %438 = vmatpush1.msra.mxu0 %v412
      %439 = vmatprep.subr.mxu0 0.0
      %440 = vmatpush1.msra.mxu0 %v413
      %441 = vmatprep.subr.mxu0 0.0
      %442 = vmatpush1.msra.mxu0 %v414
      %443 = vmatprep.subr.mxu0 0.0
      %444 = vmatpush1.msra.mxu0 %v415
      %445 = vmatprep.subr.mxu0 0.0
      %446 = vmatpush1.msra.mxu0 %v416
      %447 = vmatprep.subr.mxu0 0.0
      %448 = vmatpush1.msra.mxu0 %v417
      %449 = vmatprep.subr.mxu0 0.0
      %450 = vmatpush1.msra.mxu0 %v418
      %451 = vmatprep.subr.mxu0 0.0
      %452 = vmatpush1.msra.mxu0 0.0
      %453 = vmatprep.subr.mxu0 0.0
      %454 = vmatpush1.msra.mxu0 0.0
      %455 = vmatprep.subr.mxu0 0.0
      %456 = vmatpush1.msra.mxu0 0.0
      %457 = vmatprep.subr.mxu0 0.0
      %458 = vmatpush1.msra.mxu0 0.0
      %459 = vmatprep.subr.mxu0 0.0
      %460 = vmatpush1.msra.mxu0 0.0
      %461 = vmatprep.subr.mxu0 0.0
      %462 = vmatpush1.msra.mxu0 0.0
      %463 = vmatprep.subr.mxu0 0.0
      %464 = vmatpush1.msra.mxu0 0.0
      %465 = vmatprep.subr.mxu0 0.0
      %466 = vmatpush1.msra.mxu0 0.0
      %467 = vmatprep.subr.mxu0 0.0
      %468 = vmatpush1.msra.mxu0 0.0
      %469 = vmatprep.subr.mxu0 0.0
      %470 = vmatpush1.msra.mxu0 0.0
      %471 = vmatprep.subr.mxu0 0.0
      %472 = vmatpush1.msra.mxu0 0.0
      %473 = vmatprep.subr.mxu0 0.0
      %474 = vmatpush1.msra.mxu0 0.0
      %475 = vmatprep.subr.mxu0 0.0
      %476 = vmatpush1.msra.mxu0 0.0
      %477 = vmatprep.subr.mxu0 0.0
      %478 = vmatpush1.msra.mxu0 0.0
      %479 = vmatprep.subr.mxu0 0.0
      %480 = vmatpush1.msra.mxu0 0.0
      %481 = vmatprep.subr.mxu0 0.0
      %482 = vmatpush1.msra.mxu0 0.0
      %483 = vmatprep.mubr.f32.mxu0 0.0
      %484 = vmatmul.mubr.f32.gmra.mrb[0].mxu0 %v401
      %v485 = vpop.f32.mrb[0].mxu0
      %v486 = vadd.f32 0.0, %v485
      %v487 = vpop.f32.mrb[0].mxu0
      %488 = vdwg.mxu0
      %v489 = vadd.f32 %v402, %v486
      %490 = vst [vmem:[#allocation2] sm:$0xff] %v489
      %v491 = vld [vmem:[#allocation3] sm:$0xff]
      %v492 = vld [vmem:[%s383] sm:$0xff]
      %v493 = vld [vmem:[%s383 + $0x8] sm:$0xff]
      %v494 = vld [vmem:[%s383 + $0x10] sm:$0xff]
      %v495 = vld [vmem:[%s383 + $0x18] sm:$0xff]
      %v496 = vld [vmem:[%s383 + $0x20] sm:$0xff]
      %v497 = vld [vmem:[%s383 + $0x28] sm:$0xff]
      %v498 = vld [vmem:[%s383 + $0x30] sm:$0xff]
      %v499 = vld [vmem:[%s383 + $0x38] sm:$0xff]
      %v500 = vld [vmem:[%s383 + $0x40] sm:$0xff]
      %v501 = vld [vmem:[%s383 + $0x48] sm:$0xff]
      %v502 = vld [vmem:[%s383 + $0x50] sm:$0xff]
      %v503 = vld [vmem:[%s383 + $0x58] sm:$0xff]
      %v504 = vld [vmem:[%s383 + $0x60] sm:$0xff]
      %v505 = vld [vmem:[%s383 + $0x68] sm:$0xff]
      %v506 = vld [vmem:[%s383 + $0x70] sm:$0xff]
      %v507 = vld [vmem:[%s383 + $0x78] sm:$0xff]
      %508 = vmatprep.subr.mxu0 0.0
      %509 = vmatpush1.msra.mxu0 %v492
      %510 = vmatprep.subr.mxu0 0.0
      %511 = vmatpush1.msra.mxu0 %v493
      %512 = vmatprep.subr.mxu0 0.0
      %513 = vmatpush1.msra.mxu0 %v494
      %514 = vmatprep.subr.mxu0 0.0
      %515 = vmatpush1.msra.mxu0 %v495
      %516 = vmatprep.subr.mxu0 0.0
      %517 = vmatpush1.msra.mxu0 %v496
      %518 = vmatprep.subr.mxu0 0.0
      %519 = vmatpush1.msra.mxu0 %v497
      %520 = vmatprep.subr.mxu0 0.0
      %521 = vmatpush1.msra.mxu0 %v498
      %522 = vmatprep.subr.mxu0 0.0
      %523 = vmatpush1.msra.mxu0 %v499
      %524 = vmatprep.subr.mxu0 0.0
      %525 = vmatpush1.msra.mxu0 %v500
      %526 = vmatprep.subr.mxu0 0.0
      %527 = vmatpush1.msra.mxu0 %v501
      %528 = vmatprep.subr.mxu0 0.0
      %529 = vmatpush1.msra.mxu0 %v502
      %530 = vmatprep.subr.mxu0 0.0
      %531 = vmatpush1.msra.mxu0 %v503
      %532 = vmatprep.subr.mxu0 0.0
      %533 = vmatpush1.msra.mxu0 %v504
      %534 = vmatprep.subr.mxu0 0.0
      %535 = vmatpush1.msra.mxu0 %v505
      %536 = vmatprep.subr.mxu0 0.0
      %537 = vmatpush1.msra.mxu0 %v506
      %538 = vmatprep.subr.mxu0 0.0
      %539 = vmatpush1.msra.mxu0 %v507
      %540 = vmatprep.subr.mxu0 0.0
      %541 = vmatpush1.msra.mxu0 0.0
      %542 = vmatprep.subr.mxu0 0.0
      %543 = vmatpush1.msra.mxu0 0.0
      %544 = vmatprep.subr.mxu0 0.0
      %545 = vmatpush1.msra.mxu0 0.0
      %546 = vmatprep.subr.mxu0 0.0
      %547 = vmatpush1.msra.mxu0 0.0
      %548 = vmatprep.subr.mxu0 0.0
      %549 = vmatpush1.msra.mxu0 0.0
      %550 = vmatprep.subr.mxu0 0.0
      %551 = vmatpush1.msra.mxu0 0.0
      %552 = vmatprep.subr.mxu0 0.0
      %553 = vmatpush1.msra.mxu0 0.0
      %554 = vmatprep.subr.mxu0 0.0
      %555 = vmatpush1.msra.mxu0 0.0
      %556 = vmatprep.subr.mxu0 0.0
      %557 = vmatpush1.msra.mxu0 0.0
      %558 = vmatprep.subr.mxu0 0.0
      %559 = vmatpush1.msra.mxu0 0.0
      %560 = vmatprep.subr.mxu0 0.0
      %561 = vmatpush1.msra.mxu0 0.0
      %562 = vmatprep.subr.mxu0 0.0
      %563 = vmatpush1.msra.mxu0 0.0
      %564 = vmatprep.subr.mxu0 0.0
      %565 = vmatpush1.msra.mxu0 0.0
      %566 = vmatprep.subr.mxu0 0.0
      %567 = vmatpush1.msra.mxu0 0.0
      %568 = vmatprep.subr.mxu0 0.0
      %569 = vmatpush1.msra.mxu0 0.0
      %570 = vmatprep.subr.mxu0 0.0
      %571 = vmatpush1.msra.mxu0 0.0
      %572 = vmatprep.mubr.f32.mxu0 0.0
      %573 = vmatmul.mubr.f32.gmra.mrb[0].mxu0 %v401
      %v574 = vpop.f32.mrb[0].mxu0
      %v575 = vadd.f32 0.0, %v574
      %v576 = vpop.f32.mrb[0].mxu0
      %577 = vdwg.mxu0
      %v578 = vadd.f32 %v491, %v575
      %579 = vst [vmem:[#allocation3] sm:$0xff] %v578
      // Predicated region
      $region61: #{mix_layer_parallel.1} parent=55 // pred_check
        %p580 = pneg %p395
      $region62: #{mix_layer_parallel.1} parent=55 // pred_check_branch
        %582 = sbr.rel (%p580) target = $region64
      $region63: #{mix_layer_parallel.1} parent=55 // pred_region
        %v583 = vld [vmem:[#allocation3] sm:$0xff]
        %v584 = vld [vmem:[%s4] sm:$0xff]
        %v585 = vld [vmem:[%s4 + $0x8] sm:$0xff]
        %v586 = vld [vmem:[%s4 + $0x10] sm:$0xff]
        %v587 = vld [vmem:[%s4 + $0x18] sm:$0xff]
        %v588 = vld [vmem:[%s4 + $0x20] sm:$0xff]
        %v589 = vld [vmem:[%s4 + $0x28] sm:$0xff]
        %v590 = vld [vmem:[%s4 + $0x30] sm:$0xff]
        %v591 = vld [vmem:[%s4 + $0x38] sm:$0xff]
        %v592 = vld [vmem:[%s4 + $0x40] sm:$0xff]
        %v593 = vld [vmem:[%s4 + $0x48] sm:$0xff]
        %v594 = vld [vmem:[%s4 + $0x50] sm:$0xff]
        %v595 = vld [vmem:[%s4 + $0x58] sm:$0xff]
        %v596 = vld [vmem:[%s4 + $0x60] sm:$0xff]
        %v597 = vld [vmem:[%s4 + $0x68] sm:$0xff]
        %v598 = vld [vmem:[%s4 + $0x70] sm:$0xff]
        %v599 = vld [vmem:[%s4 + $0x78] sm:$0xff]
        %600 = vmatprep.subr.mxu0 0.0
        %601 = vmatpush1.msra.mxu0 %v584
        %602 = vmatprep.subr.mxu0 0.0
        %603 = vmatpush1.msra.mxu0 %v585
        %604 = vmatprep.subr.mxu0 0.0
        %605 = vmatpush1.msra.mxu0 %v586
        %606 = vmatprep.subr.mxu0 0.0
        %607 = vmatpush1.msra.mxu0 %v587
        %608 = vmatprep.subr.mxu0 0.0
        %609 = vmatpush1.msra.mxu0 %v588
        %610 = vmatprep.subr.mxu0 0.0
        %611 = vmatpush1.msra.mxu0 %v589
        %612 = vmatprep.subr.mxu0 0.0
        %613 = vmatpush1.msra.mxu0 %v590
        %614 = vmatprep.subr.mxu0 0.0
        %615 = vmatpush1.msra.mxu0 %v591
        %616 = vmatprep.subr.mxu0 0.0
        %617 = vmatpush1.msra.mxu0 %v592
        %618 = vmatprep.subr.mxu0 0.0
        %619 = vmatpush1.msra.mxu0 %v593
        %620 = vmatprep.subr.mxu0 0.0
        %621 = vmatpush1.msra.mxu0 %v594
        %622 = vmatprep.subr.mxu0 0.0
        %623 = vmatpush1.msra.mxu0 %v595
        %624 = vmatprep.subr.mxu0 0.0
        %625 = vmatpush1.msra.mxu0 %v596
        %626 = vmatprep.subr.mxu0 0.0
        %627 = vmatpush1.msra.mxu0 %v597
        %628 = vmatprep.subr.mxu0 0.0
        %629 = vmatpush1.msra.mxu0 %v598
        %630 = vmatprep.subr.mxu0 0.0
        %631 = vmatpush1.msra.mxu0 %v599
        %632 = vmatprep.subr.mxu0 0.0
        %633 = vmatpush1.msra.mxu0 0.0
        %634 = vmatprep.subr.mxu0 0.0
        %635 = vmatpush1.msra.mxu0 0.0
        %636 = vmatprep.subr.mxu0 0.0
        %637 = vmatpush1.msra.mxu0 0.0
        %638 = vmatprep.subr.mxu0 0.0
        %639 = vmatpush1.msra.mxu0 0.0
        %640 = vmatprep.subr.mxu0 0.0
        %641 = vmatpush1.msra.mxu0 0.0
        %642 = vmatprep.subr.mxu0 0.0
        %643 = vmatpush1.msra.mxu0 0.0
        %644 = vmatprep.subr.mxu0 0.0
        %645 = vmatpush1.msra.mxu0 0.0
        %646 = vmatprep.subr.mxu0 0.0
        %647 = vmatpush1.msra.mxu0 0.0
        %648 = vmatprep.subr.mxu0 0.0
        %649 = vmatpush1.msra.mxu0 0.0
        %650 = vmatprep.subr.mxu0 0.0
        %651 = vmatpush1.msra.mxu0 0.0
        %652 = vmatprep.subr.mxu0 0.0
        %653 = vmatpush1.msra.mxu0 0.0
        %654 = vmatprep.subr.mxu0 0.0
        %655 = vmatpush1.msra.mxu0 0.0
        %656 = vmatprep.subr.mxu0 0.0
        %657 = vmatpush1.msra.mxu0 0.0
        %658 = vmatprep.subr.mxu0 0.0
        %659 = vmatpush1.msra.mxu0 0.0
        %660 = vmatprep.subr.mxu0 0.0
        %661 = vmatpush1.msra.mxu0 0.0
        %662 = vmatprep.subr.mxu0 0.0
        %663 = vmatpush1.msra.mxu0 0.0
        %664 = vmatprep.mubr.f32.mxu0 0.0
        %665 = vmatmul.mubr.f32.gmra.mrb[0].mxu0 %v583
        %v666 = vpop.f32.mrb[0].mxu0
        %v667 = vadd.f32 0.0, %v666
        %v668 = vpop.f32.mrb[0].mxu0
        %669 = vdwg.mxu0
        %v670 = vld [vmem:[#allocation2] sm:$0xff]
        %v671 = vadd.f32 %v670, %v667
        %v672 = vld [vmem:[%s3] sm:$0x1]
        %v674 = vlaneseq
        %v675 = vshrl.u32 %v674, 7
        %v676 = vsub.s32 0, %v675
        %v677 = vrot.slane %v672, %v676
        %v679 = vadd.f32 %v671, %v677
        %v680 = vld [vmem:[%s5] sm:$0xff]
        %v681 = vld [vmem:[%s5 + $0x8] sm:$0xff]
        %v682 = vld [vmem:[%s5 + $0x10] sm:$0xff]
        %v683 = vld [vmem:[%s5 + $0x18] sm:$0xff]
        %v684 = vld [vmem:[%s5 + $0x20] sm:$0xff]
        %v685 = vld [vmem:[%s5 + $0x28] sm:$0xff]
        %v686 = vld [vmem:[%s5 + $0x30] sm:$0xff]
        %v687 = vld [vmem:[%s5 + $0x38] sm:$0xff]
        %v688 = vld [vmem:[%s5 + $0x40] sm:$0xff]
        %v689 = vld [vmem:[%s5 + $0x48] sm:$0xff]
        %v690 = vld [vmem:[%s5 + $0x50] sm:$0xff]
        %v691 = vld [vmem:[%s5 + $0x58] sm:$0xff]
        %v692 = vld [vmem:[%s5 + $0x60] sm:$0xff]
        %v693 = vld [vmem:[%s5 + $0x68] sm:$0xff]
        %v694 = vld [vmem:[%s5 + $0x70] sm:$0xff]
        %v695 = vld [vmem:[%s5 + $0x78] sm:$0xff]
        %v696 = vld [vmem:[%s6] sm:$0x1]
        %v698 = vlaneseq
        %v699 = vshrl.u32 %v698, 7
        %v700 = vsub.s32 0, %v699
        %v701 = vrot.slane %v696, %v700
        %703 = vmatprep.subr.mxu0 0.0
        %704 = vmatpush1.msra.mxu0 %v680
        %705 = vmatprep.subr.mxu0 0.0
        %706 = vmatpush1.msra.mxu0 %v681
        %707 = vmatprep.subr.mxu0 0.0
        %708 = vmatpush1.msra.mxu0 %v682
        %709 = vmatprep.subr.mxu0 0.0
        %710 = vmatpush1.msra.mxu0 %v683
        %711 = vmatprep.subr.mxu0 0.0
        %712 = vmatpush1.msra.mxu0 %v684
        %713 = vmatprep.subr.mxu0 0.0
        %714 = vmatpush1.msra.mxu0 %v685
        %715 = vmatprep.subr.mxu0 0.0
        %716 = vmatpush1.msra.mxu0 %v686
        %717 = vmatprep.subr.mxu0 0.0
        %718 = vmatpush1.msra.mxu0 %v687
        %719 = vmatprep.subr.mxu0 0.0
        %720 = vmatpush1.msra.mxu0 %v688
        %721 = vmatprep.subr.mxu0 0.0
        %722 = vmatpush1.msra.mxu0 %v689
        %723 = vmatprep.subr.mxu0 0.0
        %724 = vmatpush1.msra.mxu0 %v690
        %725 = vmatprep.subr.mxu0 0.0
        %726 = vmatpush1.msra.mxu0 %v691
        %727 = vmatprep.subr.mxu0 0.0
        %728 = vmatpush1.msra.mxu0 %v692
        %729 = vmatprep.subr.mxu0 0.0
        %730 = vmatpush1.msra.mxu0 %v693
        %731 = vmatprep.subr.mxu0 0.0
        %732 = vmatpush1.msra.mxu0 %v694
        %733 = vmatprep.subr.mxu0 0.0
        %734 = vmatpush1.msra.mxu0 %v695
        %735 = vmatprep.subr.mxu0 0.0
        %736 = vmatpush1.msra.mxu0 0.0
        %737 = vmatprep.subr.mxu0 0.0
        %738 = vmatpush1.msra.mxu0 0.0
        %739 = vmatprep.subr.mxu0 0.0
        %740 = vmatpush1.msra.mxu0 0.0
        %741 = vmatprep.subr.mxu0 0.0
        %742 = vmatpush1.msra.mxu0 0.0
        %743 = vmatprep.subr.mxu0 0.0
        %744 = vmatpush1.msra.mxu0 0.0
        %745 = vmatprep.subr.mxu0 0.0
        %746 = vmatpush1.msra.mxu0 0.0
        %747 = vmatprep.subr.mxu0 0.0
        %748 = vmatpush1.msra.mxu0 0.0
        %749 = vmatprep.subr.mxu0 0.0
        %750 = vmatpush1.msra.mxu0 0.0
        %751 = vmatprep.subr.mxu0 0.0
        %752 = vmatpush1.msra.mxu0 0.0
        %753 = vmatprep.subr.mxu0 0.0
        %754 = vmatpush1.msra.mxu0 0.0
        %755 = vmatprep.subr.mxu0 0.0
        %756 = vmatpush1.msra.mxu0 0.0
        %757 = vmatprep.subr.mxu0 0.0
        %758 = vmatpush1.msra.mxu0 0.0
        %759 = vmatprep.subr.mxu0 0.0
        %760 = vmatpush1.msra.mxu0 0.0
        %761 = vmatprep.subr.mxu0 0.0
        %762 = vmatpush1.msra.mxu0 0.0
        %763 = vmatprep.subr.mxu0 0.0
        %764 = vmatpush1.msra.mxu0 0.0
        %765 = vmatprep.subr.mxu0 0.0
        %766 = vmatpush1.msra.mxu0 0.0
        %767 = vmatprep.mubr.f32.mxu0 0.0
        %768 = vmatmul.mubr.f32.gmra.mrb[0].mxu0 %v679
        %v769 = vpop.f32.mrb[0].mxu0
        %v770 = vadd.f32 %v701, %v769
        %v771 = vpop.f32.mrb[0].mxu0
        %772 = vdwg.mxu0
        %v773 = vmul.f32 %v770, %v770
        %v774 = vmul.f32 %v770, %v773
        %v775 = vmul.f32 %v774, 0.044715
        %v776 = vadd.f32 %v770, %v775
        %v777 = vmul.f32 %v776, 0.7978846
        %v778 = vtanh.pop %v777
        %v779 = vadd.f32 %v778, 1.0
        %v780 = vmul.f32 %v779, 0.5
        %v781 = vmul.f32 %v770, %v780
        %v782 = vld [vmem:[%s7] sm:$0xff]
        %v783 = vld [vmem:[%s7 + $0x8] sm:$0xff]
        %v784 = vld [vmem:[%s7 + $0x10] sm:$0xff]
        %v785 = vld [vmem:[%s7 + $0x18] sm:$0xff]
        %v786 = vld [vmem:[%s7 + $0x20] sm:$0xff]
        %v787 = vld [vmem:[%s7 + $0x28] sm:$0xff]
        %v788 = vld [vmem:[%s7 + $0x30] sm:$0xff]
        %v789 = vld [vmem:[%s7 + $0x38] sm:$0xff]
        %v790 = vld [vmem:[%s7 + $0x40] sm:$0xff]
        %v791 = vld [vmem:[%s7 + $0x48] sm:$0xff]
        %v792 = vld [vmem:[%s7 + $0x50] sm:$0xff]
        %v793 = vld [vmem:[%s7 + $0x58] sm:$0xff]
        %v794 = vld [vmem:[%s7 + $0x60] sm:$0xff]
        %v795 = vld [vmem:[%s7 + $0x68] sm:$0xff]
        %v796 = vld [vmem:[%s7 + $0x70] sm:$0xff]
        %v797 = vld [vmem:[%s7 + $0x78] sm:$0xff]
        %v798 = vld [vmem:[%s8] sm:$0x1]
        %v800 = vlaneseq
        %v801 = vshrl.u32 %v800, 7
        %v802 = vsub.s32 0, %v801
        %v803 = vrot.slane %v798, %v802
        %805 = vmatprep.subr.mxu0 0.0
        %806 = vmatpush1.msra.mxu0 %v782
        %807 = vmatprep.subr.mxu0 0.0
        %808 = vmatpush1.msra.mxu0 %v783
        %809 = vmatprep.subr.mxu0 0.0
        %810 = vmatpush1.msra.mxu0 %v784
        %811 = vmatprep.subr.mxu0 0.0
        %812 = vmatpush1.msra.mxu0 %v785
        %813 = vmatprep.subr.mxu0 0.0
        %814 = vmatpush1.msra.mxu0 %v786
        %815 = vmatprep.subr.mxu0 0.0
        %816 = vmatpush1.msra.mxu0 %v787
        %817 = vmatprep.subr.mxu0 0.0
        %818 = vmatpush1.msra.mxu0 %v788
        %819 = vmatprep.subr.mxu0 0.0
        %820 = vmatpush1.msra.mxu0 %v789
        %821 = vmatprep.subr.mxu0 0.0
        %822 = vmatpush1.msra.mxu0 %v790
        %823 = vmatprep.subr.mxu0 0.0
        %824 = vmatpush1.msra.mxu0 %v791
        %825 = vmatprep.subr.mxu0 0.0
        %826 = vmatpush1.msra.mxu0 %v792
        %827 = vmatprep.subr.mxu0 0.0
        %828 = vmatpush1.msra.mxu0 %v793
        %829 = vmatprep.subr.mxu0 0.0
        %830 = vmatpush1.msra.mxu0 %v794
        %831 = vmatprep.subr.mxu0 0.0
        %832 = vmatpush1.msra.mxu0 %v795
        %833 = vmatprep.subr.mxu0 0.0
        %834 = vmatpush1.msra.mxu0 %v796
        %835 = vmatprep.subr.mxu0 0.0
        %836 = vmatpush1.msra.mxu0 %v797
        %837 = vmatprep.subr.mxu0 0.0
        %838 = vmatpush1.msra.mxu0 0.0
        %839 = vmatprep.subr.mxu0 0.0
        %840 = vmatpush1.msra.mxu0 0.0
        %841 = vmatprep.subr.mxu0 0.0
        %842 = vmatpush1.msra.mxu0 0.0
        %843 = vmatprep.subr.mxu0 0.0
        %844 = vmatpush1.msra.mxu0 0.0
        %845 = vmatprep.subr.mxu0 0.0
        %846 = vmatpush1.msra.mxu0 0.0
        %847 = vmatprep.subr.mxu0 0.0
        %848 = vmatpush1.msra.mxu0 0.0
        %849 = vmatprep.subr.mxu0 0.0
        %850 = vmatpush1.msra.mxu0 0.0
        %851 = vmatprep.subr.mxu0 0.0
        %852 = vmatpush1.msra.mxu0 0.0
        %853 = vmatprep.subr.mxu0 0.0
        %854 = vmatpush1.msra.mxu0 0.0
        %855 = vmatprep.subr.mxu0 0.0
        %856 = vmatpush1.msra.mxu0 0.0
        %857 = vmatprep.subr.mxu0 0.0
        %858 = vmatpush1.msra.mxu0 0.0
        %859 = vmatprep.subr.mxu0 0.0
        %860 = vmatpush1.msra.mxu0 0.0
        %861 = vmatprep.subr.mxu0 0.0
        %862 = vmatpush1.msra.mxu0 0.0
        %863 = vmatprep.subr.mxu0 0.0
        %864 = vmatpush1.msra.mxu0 0.0
        %865 = vmatprep.subr.mxu0 0.0
        %866 = vmatpush1.msra.mxu0 0.0
        %867 = vmatprep.subr.mxu0 0.0
        %868 = vmatpush1.msra.mxu0 0.0
        %869 = vmatprep.mubr.f32.mxu0 0.0
        %870 = vmatmul.mubr.f32.gmra.mrb[0].mxu0 %v781
        %v871 = vpop.f32.mrb[0].mxu0
        %v872 = vadd.f32 %v803, %v871
        %v873 = vpop.f32.mrb[0].mxu0
        %874 = vdwg.mxu0
        %v875 = vadd.f32 %v679, %v872
        %876 = vst [vmem:[%s394] sm:$0xff] %v875
      $region64: #{mix_layer_parallel.1} parent=55 // pred_fallthru
        _
      %p877 = scmp.lt.s32.totalorder %s24, 1
      %s878 = scalar_select %p877, %s24, 1
      %s879 = smul.addr %s878, 8
      %s880 = scalar_lea.vmem %s9, %s879
      // Predicated region
      $region65: #{mix_layer_parallel.1} parent=55 // pred_check
        %p881 = pneg %p256
      $region66: #{mix_layer_parallel.1} parent=55 // pred_check_branch
        %883 = sbr.rel (%p881) target = $region68
      $region67: #{mix_layer_parallel.1} parent=55 // pred_region
        _
      $region68: #{mix_layer_parallel.1} parent=55 // pred_fallthru
        _
    $region56: #{mix_layer_parallel.1} parent=5 // pred_fallthru
      _
    %p884 = scmp.le.s32.totalorder 2, %s15
    // Predicated region
    $region69: #{mix_layer_parallel.1} parent=5 // pred_check
      %p885 = pneg %p884
    $region70: #{mix_layer_parallel.1} parent=5 // pred_check_branch
      %887 = sbr.rel (%p885) target = $region72
    $region71: #{mix_layer_parallel.1} parent=5 // pred_region
      %s888 = ssub.s32 %s15, 2
      // Predicated region
      $region73: #{mix_layer_parallel.1} parent=71 // pred_check
        %p889 = pneg %p262
      $region74: #{mix_layer_parallel.1} parent=71 // pred_check_branch
        %891 = sbr.rel (%p889) target = $region76
      $region75: #{mix_layer_parallel.1} parent=71 // pred_region
        %p892 = scmp.lt.s32.totalorder %s26, 1
        %s893 = scalar_select %p892, %s26, 1
        %s894 = smul.addr %s893, 8
        %s895 = scalar_lea.vmem %s9, %s894
      $region76: #{mix_layer_parallel.1} parent=71 // pred_fallthru
        _
    $region72: #{mix_layer_parallel.1} parent=5 // pred_fallthru
      _
  $region6: #{mix_layer_parallel.1} parent=0 // loop_footer
    %s19 = sadd.s32 1, %s15
  $region7: #{mix_layer_parallel.1} parent=0 // loop_footer_branch
    %14 = sbr.rel target = $region3
  $region8: #{mix_layer_parallel.1} parent=0 // loop_exit
    _

</llo_original>
